<compile_context>
chip_gen: v6e
topology: v6e:2x2x1
jax: 0.10.0
libtpu: 0.0.40
codegen_flags: <defaults>
</compile_context>

<pallas_src>
import functools
import math

import jax
import jax.numpy as jnp
from jax.experimental import pallas as pl
from jax.experimental.pallas import tpu as pltpu


def _round_up(x: int, m: int) -> int:
    return (x + m - 1) // m * m


def _sublane(dtype) -> int:
    # bf16 packs 16 rows per vreg; f32 packs 8.
    return 16 if jnp.dtype(dtype).itemsize == 2 else 8


def _vmem_budget_bytes() -> int:
    """Per-kernel VMEM budget: ~75% of physical, capped at 100 MiB.
    -> ~96-100 MiB on v5e/v6e (128 MiB physical), ~48 MiB on v7x (64 MiB physical)."""
    try:
        cap = int(pltpu.get_tpu_info().vmem_capacity_bytes)
    except Exception:
        cap = 64 * 1024 * 1024  # conservative default (v7x per-core) if query unavailable
    return min(int(cap * 3 // 4), 100 * 1024 * 1024)


def _resident_spec(shape):
    """BlockSpec for a weight/bias whose index_map is constant across the grid.

    Single-buffered (pl.Buffered(1)): the block is never re-fetched, so double-buffering
    only doubles its VMEM footprint (matters most on v7x's 64 MiB VMEM)."""
    idx = lambda i: (0,) * len(shape)
    try:
        return pl.BlockSpec(shape, idx, pipeline_mode=pl.Buffered(1))
    except (TypeError, ValueError):  # older pallas without pipeline_mode support
        return pl.BlockSpec(shape, idx)


# ----------------------------- fused MLP kernel ------------------------------


def _mlp_fused_kernel(x_ref, *refs, n_layers: int, compute_dtype):
    # refs = (w0, b0, w1, b1, ..., o_ref); weights fully resident in VMEM, pre-cast.
    o_ref = refs[-1]
    h = x_ref[...]                       # already compute_dtype (pre-cast in wrapper)
    for li in range(n_layers):
        w = refs[2 * li][...]            # compute_dtype
        b = refs[2 * li + 1][...]        # float32
        y = jnp.dot(h, w, preferred_element_type=jnp.float32)
        y = y + b
        if li != n_layers - 1:
            y = jnp.maximum(y, 0.0)
            # TODO(synk): training-mode Dropout(0.1) not implemented (eval-mode identity).
            h = y.astype(compute_dtype)
        else:
            h = y
    o_ref[...] = h.astype(o_ref.dtype)


def pallas_mlp_fused(x, flat_params, *, n_layers, out_dim, out_dim_pad, out_dtype,
                     compute_dtype=jnp.bfloat16, block_rows=256, vmem_budget=None):
    """Whole MLP stack in one pallas_call; grid only over batch-row tiles.

    Weights stay resident (single-buffered) in VMEM across grid steps, intermediates
    never touch HBM, final output is a lane-dense (128-multiple) slab sliced in the
    wrapper.  The batch tile is bounded by the per-generation VMEM budget."""
    if vmem_budget is None:
        vmem_budget = _vmem_budget_bytes()
    N, K = x.shape
    sub = _sublane(compute_dtype)
    c_item = jnp.dtype(compute_dtype).itemsize
    o_item = jnp.dtype(out_dtype).itemsize
    w_bytes = sum(int(p.size) * p.dtype.itemsize for p in flat_params)

    tm = min(block_rows, _round_up(N, sub))

    def _usage(t):
        # x double-buffered + single-buffered resident weights + double-buffered output
        return 2 * t * K * c_item + w_bytes + 2 * t * out_dim_pad * o_item

    while tm > sub and _usage(tm) > vmem_budget:
        tm = max(sub, _round_up(tm // 2, sub))

    # Give the 'parallel' batch axis >=2 programs when N allows it (v7x: 2 TensorCores).
    if _round_up(N, tm) // tm < 2:
        tm_half = _round_up(max((N + 1) // 2, sub), sub)
        if tm_half < tm:
            tm = tm_half

    N_pad = _round_up(N, tm)
    x = x.astype(compute_dtype)          # pre-cast activation: halves x DMA bytes
    if N_pad != N:
        x = jnp.pad(x, ((0, N_pad - N), (0, 0)))

    in_specs = [pl.BlockSpec((tm, K), lambda i: (i, 0))]
    for p in flat_params:
        in_specs.append(_resident_spec(p.shape))

    flops = 2 * N_pad * sum(int(flat_params[2 * li].shape[0]) * int(flat_params[2 * li].shape[1])
                            for li in range(n_layers))
    bytes_accessed = int(x.size) * c_item + w_bytes + N_pad * out_dim_pad * o_item

    out = pl.pallas_call(
        functools.partial(_mlp_fused_kernel, n_layers=n_layers,
                          compute_dtype=compute_dtype),
        out_shape=jax.ShapeDtypeStruct((N_pad, out_dim_pad), out_dtype),
        grid=(N_pad // tm,),
        in_specs=in_specs,
        out_specs=pl.BlockSpec((tm, out_dim_pad), lambda i: (i, 0)),
        compiler_params=pltpu.CompilerParams(
            dimension_semantics=("parallel",),
            vmem_limit_bytes=int(vmem_budget)),
        cost_estimate=pl.CostEstimate(flops=int(flops), transcendentals=0,
                                      bytes_accessed=int(bytes_accessed)),
    )(x, *flat_params)
    return out[:N, :out_dim]


# --------------------------- tiled linear (fallback) --------------------------


def _linear_tiled_kernel(x_ref, w_ref, b_ref, o_ref, acc_ref, *, relu: bool):
    k = pl.program_id(2)

    @pl.when(k == 0)
    def _():
        acc_ref[...] = jnp.zeros_like(acc_ref)

    acc_ref[...] += jnp.dot(x_ref[...], w_ref[...], preferred_element_type=jnp.float32)

    @pl.when(k == pl.num_programs(2) - 1)
    def _():
        y = acc_ref[...] + b_ref[...]
        if relu:
            y = jnp.maximum(y, 0.0)
        o_ref[...] = y.astype(o_ref.dtype)


def _prep_linear(w, b, *, compute_dtype, tn, tk):
    """Cast + pad weights once (hoisted out of the call path)."""
    K, M = w.shape
    K_pad, M_pad = _round_up(K, tk), _round_up(M, tn)
    w = w.astype(compute_dtype)
    if (K_pad, M_pad) != (K, M):
        w = jnp.pad(w, ((0, K_pad - K), (0, M_pad - M)))
    b2 = jnp.pad(b.astype(jnp.float32), (0, M_pad - M)).reshape(1, M_pad)
    return w, b2


def _apply_linear_tiled(x, w_p, b_p, *, M, relu, out_dtype, compute_dtype,
                        tm=512, tn=512, tk=1024, vmem_budget=None):
    """y = x @ w + b (optional ReLU), tiled over (N, M, K) with a VMEM f32 accumulator.
    w_p / b_p are pre-cast, pre-padded (see _prep_linear)."""
    if vmem_budget is None:
        vmem_budget = _vmem_budget_bytes()
    N, K = x.shape
    K_pad, M_pad = w_p.shape
    sub = _sublane(compute_dtype)
    tm = min(tm, _round_up(N, sub))
    N_pad = _round_up(N, tm)

    x = x.astype(compute_dtype)
    if (N_pad, K_pad) != (N, K):
        x = jnp.pad(x, ((0, N_pad - N), (0, K_pad - K)))

    grid = (N_pad // tm, M_pad // tn, K_pad // tk)
    c_item = jnp.dtype(compute_dtype).itemsize
    o_item = jnp.dtype(out_dtype).itemsize
    flops = 2 * N_pad * K_pad * M_pad
    bytes_accessed = (int(x.size) * c_item + int(w_p.size) * w_p.dtype.itemsize
                      + int(b_p.size) * 4 + N_pad * M_pad * o_item)

    out = pl.pallas_call(
        functools.partial(_linear_tiled_kernel, relu=relu),
        out_shape=jax.ShapeDtypeStruct((N_pad, M_pad), out_dtype),
        grid=grid,
        in_specs=[
            pl.BlockSpec((tm, tk), lambda i, j, k: (i, k)),
            pl.BlockSpec((tk, tn), lambda i, j, k: (k, j)),
            pl.BlockSpec((1, tn), lambda i, j, k: (0, j)),
        ],
        out_specs=pl.BlockSpec((tm, tn), lambda i, j, k: (i, j)),
        scratch_shapes=[pltpu.VMEM((tm, tn), jnp.float32)],
        compiler_params=pltpu.CompilerParams(
            dimension_semantics=("parallel", "parallel", "arbitrary"),
            vmem_limit_bytes=int(vmem_budget)),
        cost_estimate=pl.CostEstimate(flops=int(flops), transcendentals=0,
                                      bytes_accessed=int(bytes_accessed)),
    )(x, w_p, b_p)
    return out[:N, :M]


def pallas_linear_tiled(x, w, b, *, relu=False, compute_dtype=jnp.bfloat16,
                        out_dtype=None, tm=512, tn=512, tk=1024, vmem_budget=None):
    """Standalone convenience wrapper: prep + apply in one call."""
    if out_dtype is None:
        out_dtype = x.dtype
    K, M = w.shape
    tn = min(tn, _round_up(M, 128))
    tk = min(tk, _round_up(K, 128))
    w_p, b_p = _prep_linear(w, b, compute_dtype=compute_dtype, tn=tn, tk=tk)
    return _apply_linear_tiled(x, w_p, b_p, M=M, relu=relu, out_dtype=out_dtype,
                               compute_dtype=compute_dtype, tm=tm, tn=tn, tk=tk,
                               vmem_budget=vmem_budget)


# ------------------------------- pool kernels ---------------------------------


def _pool_single_kernel(x_ref, o_ref, *, mode: str, inv_s: float):
    # One block covers the whole spatial axis: direct reduce, no accumulator.
    x = x_ref[...].astype(jnp.float32)
    if mode == "max":
        r = jnp.max(x, axis=-1, keepdims=True)
    else:
        r = jnp.sum(x, axis=-1, keepdims=True) * inv_s
    o_ref[...] = r.astype(o_ref.dtype)


def _pool_stream_kernel(x_ref, o_ref, acc_ref, *, mode: str, inv_s: float):
    # Streaming over lane blocks.  Per step: fold 128-lane slices with plain VPU ops
    # into a (tr, 128) accumulator; the single cross-lane (XLU) reduce only runs in
    # the finalize branch.
    sj = pl.program_id(1)
    is_max = mode == "max"

    @pl.when(sj == 0)
    def _():
        if is_max:
            acc_ref[...] = jnp.full_like(acc_ref, -jnp.inf)
        else:
            acc_ref[...] = jnp.zeros_like(acc_ref)

    x = x_ref[...].astype(jnp.float32)
    ts = x.shape[-1]                       # static, multiple of 128 by construction
    part = x[:, 0:128]
    for c in range(1, ts // 128):
        sl = x[:, c * 128:(c + 1) * 128]
        part = jnp.maximum(part, sl) if is_max else part + sl
    if is_max:
        acc_ref[...] = jnp.maximum(acc_ref[...], part)
    else:
        acc_ref[...] = acc_ref[...] + part

    @pl.when(sj == pl.num_programs(1) - 1)
    def _():
        a = acc_ref[...]
        if is_max:
            r = jnp.max(a, axis=-1, keepdims=True)
        else:
            r = jnp.sum(a, axis=-1, keepdims=True) * inv_s
        o_ref[...] = r.astype(o_ref.dtype)


def pallas_global_pool3d(x_ncs, *, mode: str, block_rows=512, block_lanes=2048,
                         vmem_budget=None):
    """Global pooling over the flattened spatial axis. x_ncs: (N, C, S) -> (N, C).

    Rows are packed as (N*C, S).  Tile sizes prefer divisors of R/S so the HBM-bound
    path never pays a wrapper-side full-tensor pad copy."""
    if vmem_budget is None:
        vmem_budget = _vmem_budget_bytes()
    N, C, S = x_ncs.shape
    R = N * C
    x2 = x_ncs.reshape(R, S)
    is_max = mode == "max"
    inv_s = 1.0 / float(S)
    pad_val = -jnp.inf if is_max else 0.0

    # ---- row (sublane) tiling: avoid padding where possible ----
    if R <= block_rows:
        # Split across 2 programs (v7x has 2 TCs) when it costs nothing (no pad).
        tr = R // 2 if (R >= 16 and R % 16 == 0) else R
    else:
        tr = None
        for cand in range(block_rows, 7, -8):       # largest multiple of 8 dividing R
            if R % cand == 0:
                tr = cand
                break
        if tr is None:
            tr = block_rows
    R_pad = _round_up(R, tr)

    common = dict(
        compiler_params=pltpu.CompilerParams,
    )
    del common  # (kept code straightforward below)

    if S <= block_lanes:
        # One lane block covers S: single-step reduce kernel.
        if R_pad != R:
            x2 = jnp.pad(x2, ((0, R_pad - R), (0, 0)), constant_values=pad_val)
        out = pl.pallas_call(
            functools.partial(_pool_single_kernel, mode=mode, inv_s=inv_s),
            out_shape=jax.ShapeDtypeStruct((R_pad, 1), x_ncs.dtype),
            grid=(R_pad // tr,),
            in_specs=[pl.BlockSpec((tr, S), lambda i: (i, 0))],
            out_specs=pl.BlockSpec((tr, 1), lambda i: (i, 0)),
            compiler_params=pltpu.CompilerParams(
                dimension_semantics=("parallel",),
                vmem_limit_bytes=int(vmem_budget)),
            cost_estimate=pl.CostEstimate(
                flops=int(R_pad * S), transcendentals=0,
                bytes_accessed=int(x2.size * x2.dtype.itemsize
                                   + R_pad * x2.dtype.itemsize)),
        )(x2)
        return out[:R, 0].reshape(N, C)

    # ---- streaming case: S > block_lanes ----
    ts = None
    for cand in range(block_lanes, 127, -128):      # largest 128-multiple dividing S
        if S % cand == 0:
            ts = cand
            break
    if ts is None:
        ts = block_lanes
    S_pad = _round_up(S, ts)
    if (R_pad, S_pad) != (R, S):
        x2 = jnp.pad(x2, ((0, R_pad - R), (0, S_pad - S)), constant_values=pad_val)

    out = pl.pallas_call(
        functools.partial(_pool_stream_kernel, mode=mode, inv_s=inv_s),
        out_shape=jax.ShapeDtypeStruct((R_pad, 1), x_ncs.dtype),
        grid=(R_pad // tr, S_pad // ts),
        in_specs=[pl.BlockSpec((tr, ts), lambda i, j: (i, j))],
        out_specs=pl.BlockSpec((tr, 1), lambda i, j: (i, 0)),
        scratch_shapes=[pltpu.VMEM((tr, 128), jnp.float32)],
        compiler_params=pltpu.CompilerParams(
            dimension_semantics=("parallel", "arbitrary"),
            vmem_limit_bytes=int(vmem_budget)),
        cost_estimate=pl.CostEstimate(
            flops=int(R_pad * S_pad), transcendentals=0,
            bytes_accessed=int(x2.size * x2.dtype.itemsize + R_pad * x2.dtype.itemsize)),
    )(x2)
    return out[:R, 0].reshape(N, C)


# --------------------------- Module-level wrapper ----------------------------


class FeatureEmbedding:
    """JAX/Pallas port of detection/src/models/feature_embedding.FeatureEmbedding."""

    # Weight stacks smaller than this (in compute dtype) are fully VMEM-resident ->
    # fused single-kernel MLP.  Also capped at half the per-generation VMEM budget.
    _FUSE_WEIGHT_BYTES = 32 * 1024 * 1024

    def __init__(
        self,
        input_channels,
        patch_size,
        embedding_method="flatten",
        pooling_type="avg",
        mlp_hidden_dims=None,
        output_dim=None,
        *,
        key=None,
        dtype=jnp.float32,
        compute_dtype=jnp.bfloat16,   # bf16 MXU: ~full peak on v5e/v6e/v7x
    ):
        self.input_channels = input_channels
        self.patch_size = patch_size
        self.embedding_method = embedding_method
        self.pooling_type = pooling_type
        self.flattened_dim = input_channels * patch_size[0] * patch_size[1] * patch_size[2]
        self.dtype = dtype
        self.compute_dtype = compute_dtype
        self.params = []
        self._vmem_budget = _vmem_budget_bytes()

        if embedding_method == "flatten":
            self.embed_dim = self.flattened_dim
        elif embedding_method == "pool":
            if pooling_type not in ("avg", "max", "adaptive"):
                raise ValueError(f"Unknown pooling type: {pooling_type}")
            self.embed_dim = input_channels
        elif embedding_method == "mlp":
            if mlp_hidden_dims is None or output_dim is None:
                raise ValueError("mlp_hidden_dims and output_dim must be specified for MLP embedding")
            if key is None:
                key = jax.random.PRNGKey(0)
            dims = [self.flattened_dim] + list(mlp_hidden_dims) + [output_dim]
            for li in range(len(dims) - 1):
                fan_in, fan_out = dims[li], dims[li + 1]
                key, kw, kb = jax.random.split(key, 3)
                bound = 1.0 / math.sqrt(fan_in)
                # torch.nn.Linear default init: U(-1/sqrt(fan_in), 1/sqrt(fan_in))
                w = jax.random.uniform(kw, (fan_in, fan_out), dtype, -bound, bound)
                b = jax.random.uniform(kb, (fan_out,), dtype, -bound, bound)
                self.params.append((w, b))
            self.embed_dim = output_dim
            self._prepare_mlp()   # cast/pad weights ONCE, hoisted out of the call path
        else:
            raise ValueError(f"Unknown embedding method: {embedding_method}")

    def _prepare_mlp(self):
        cdt = self.compute_dtype
        c_item = jnp.dtype(cdt).itemsize
        n_layers = len(self.params)
        w_bytes = sum(w.size * c_item + b.size * 4 for w, b in self.params)
        self._fuse = w_bytes <= min(self._FUSE_WEIGHT_BYTES, self._vmem_budget // 2)

        if self._fuse:
            M_out = self.params[-1][0].shape[1]
            M_pad = _round_up(M_out, 128)          # lane-dense output slab
            flat = []
            for li, (w, b) in enumerate(self.params):
                w = w.astype(cdt)
                b = b.astype(jnp.float32)
                if li == n_layers - 1 and M_pad != M_out:
                    w = jnp.pad(w, ((0, 0), (0, M_pad - M_out)))
                    b = jnp.pad(b, (0, M_pad - M_out))
                flat.append(w)
                flat.append(b.reshape(1, -1))
            self._fused_flat = flat
            self._out_dim_pad = M_pad
        else:
            prepped = []
            for (w, b) in self.params:
                K, M = w.shape
                tn = min(512, _round_up(M, 128))
                tk = min(1024, _round_up(K, 128))
                w_p, b_p = _prep_linear(w, b, compute_dtype=cdt, tn=tn, tk=tk)
                prepped.append(dict(w=w_p, b=b_p, M=M, tn=tn, tk=tk))
            self._tiled_prepped = prepped

    def __call__(self, feature_patches):
        # feature_patches: (N, C, D, H, W)
        N = feature_patches.shape[0]
        if self.embedding_method == "flatten":
            # Pure reshape: no compute hot path, plain-JAX glue.
            return feature_patches.reshape(N, -1)

        if self.embedding_method == "pool":
            x = feature_patches.reshape(N, self.input_channels, -1)   # (N, C, S)
            mode = "max" if self.pooling_type == "max" else "avg"      # 'adaptive' == global mean
            return pallas_global_pool3d(x, mode=mode, vmem_budget=self._vmem_budget)

        # mlp
        h = feature_patches.reshape(N, -1).astype(self.compute_dtype)
        if self._fuse:
            return pallas_mlp_fused(
                h, self._fused_flat, n_layers=len(self.params),
                out_dim=self.embed_dim, out_dim_pad=self._out_dim_pad,
                out_dtype=self.dtype, compute_dtype=self.compute_dtype,
                vmem_budget=self._vmem_budget)
        n_layers = len(self.params)
        for li, p in enumerate(self._tiled_prepped):
            last = li == n_layers - 1
            h = _apply_linear_tiled(
                h, p["w"], p["b"], M=p["M"], relu=not last,
                out_dtype=self.dtype if last else self.compute_dtype,  # bf16 intermediates
                compute_dtype=self.compute_dtype,
                tm=512, tn=p["tn"], tk=p["tk"], vmem_budget=self._vmem_budget)
        return h


# ----------------------------------- main ------------------------------------

if __name__ == "__main__":
    key = jax.random.PRNGKey(0)
    k_in, k_mlp, k_pool = jax.random.split(key, 3)

    N, C, D, H, W = 8, 4, 2, 4, 4  # small shapes; flattened_dim = 128
    feature_patches = jax.random.normal(k_in, (N, C, D, H, W), jnp.float32)

    # --- mlp mode (fused MLP kernel, bf16 MXU) ---
    mlp_mod = FeatureEmbedding(
        input_channels=C, patch_size=(D, H, W), embedding_method="mlp",
        mlp_hidden_dims=[64], output_dim=32, key=k_mlp)
    out_mlp = jax.block_until_ready(mlp_mod(feature_patches))
    assert out_mlp.shape == (N, 32)

    # f32 reference; tolerance relaxed for bf16 MXU compute
    h_ref = feature_patches.reshape(N, -1)
    for li, (w, b) in enumerate(mlp_mod.params):
        h_ref = h_ref @ w + b
        if li != len(mlp_mod.params) - 1:
            h_ref = jnp.maximum(h_ref, 0.0)
    assert jnp.allclose(out_mlp, h_ref, atol=5e-2, rtol=5e-2), \
        float(jnp.max(jnp.abs(out_mlp - h_ref)))

    # --- tiled-linear fallback path (exercised directly, bf16 compute) ---
    w0, b0 = mlp_mod.params[0]
    y_tiled = jax.block_until_ready(pallas_linear_tiled(
        feature_patches.reshape(N, -1), w0, b0, relu=True))
    y_tiled_ref = jnp.maximum(feature_patches.reshape(N, -1) @ w0 + b0, 0.0)
    assert jnp.allclose(y_tiled, y_tiled_ref, atol=5e-2, rtol=5e-2)

    # --- pool modes (single-block reduce kernel) ---
    ref_avg = feature_patches.reshape(N, C, -1).mean(axis=-1)
    avg_mod = FeatureEmbedding(C, (D, H, W), embedding_method="pool", pooling_type="avg")
    out_avg = jax.block_until_ready(avg_mod(feature_patches))
    assert out_avg.shape == (N, C)
    assert jnp.allclose(out_avg, ref_avg, atol=1e-5, rtol=1e-5)

    max_mod = FeatureEmbedding(C, (D, H, W), embedding_method="pool", pooling_type="max")
    out_max = jax.block_until_ready(max_mod(feature_patches))
    ref_max = feature_patches.reshape(N, C, -1).max(axis=-1)
    assert jnp.allclose(out_max, ref_max, atol=1e-5, rtol=1e-5)

    adapt_mod = FeatureEmbedding(C, (D, H, W), embedding_method="pool", pooling_type="adaptive")
    out_adapt = jax.block_until_ready(adapt_mod(feature_patches))
    assert jnp.allclose(out_adapt, ref_avg, atol=1e-5, rtol=1e-5)

    # --- streaming pool kernel (forced with a small lane block) ---
    xs = jax.random.normal(k_pool, (4, 4, 512), jnp.float32)
    s_avg = jax.block_until_ready(pallas_global_pool3d(xs, mode="avg", block_lanes=256))
    assert jnp.allclose(s_avg, xs.mean(axis=-1), atol=1e-4, rtol=1e-4)
    s_max = jax.block_until_ready(pallas_global_pool3d(xs, mode="max", block_lanes=256))
    assert jnp.allclose(s_max, xs.max(axis=-1), atol=1e-5, rtol=1e-5)

    # --- flatten mode (reshape only) ---
    flat_mod = FeatureEmbedding(C, (D, H, W), embedding_method="flatten")
    out_flat = jax.block_until_ready(flat_mod(feature_patches))
    assert out_flat.shape == (N, C * D * H * W)
    assert jnp.allclose(out_flat, feature_patches.reshape(N, -1))

    print("KERNEL_OK")
</pallas_src>

<mosaic_0001>
module attributes {stable_mosaic.version = 11 : i64} {
  func.func @_mlp_fused_kernel(%arg0: i32, %arg1: memref<16x128xbf16, #tpu.memory_space<vmem>>, %arg2: memref<128x64xbf16, #tpu.memory_space<vmem>>, %arg3: memref<1x64xf32, #tpu.memory_space<vmem>>, %arg4: memref<64x128xbf16, #tpu.memory_space<vmem>>, %arg5: memref<1x128xf32, #tpu.memory_space<vmem>>, %arg6: memref<16x128xf32, #tpu.memory_space<vmem>>) attributes {dimension_semantics = [#tpu.dimension_semantics<parallel>], iteration_bounds = array<i64: 1>, scalar_prefetch = 0 : i64, scratch_operands = 0 : i64, tpu.core_type = #tpu.core_type<tc>, window_params = [{transform_indices = @transform_0, window_bounds = array<i64: 16, 128>}, {pipeline_mode = #tpu.pipeline_mode<synchronous>, transform_indices = @transform_1, window_bounds = array<i64: 128, 64>}, {pipeline_mode = #tpu.pipeline_mode<synchronous>, transform_indices = @transform_2, window_bounds = array<i64: 1, 64>}, {pipeline_mode = #tpu.pipeline_mode<synchronous>, transform_indices = @transform_3, window_bounds = array<i64: 64, 128>}, {pipeline_mode = #tpu.pipeline_mode<synchronous>, transform_indices = @transform_4, window_bounds = array<i64: 1, 128>}, {transform_indices = @transform_5, window_bounds = array<i64: 16, 128>}]} {
    %c0 = arith.constant 0 : index
    %c0_0 = arith.constant 0 : index
    %0 = vector.load %arg1[%c0, %c0_0] : memref<16x128xbf16, #tpu.memory_space<vmem>>, vector<16x128xbf16>
    %c0_1 = arith.constant 0 : index
    %c0_2 = arith.constant 0 : index
    %1 = vector.load %arg2[%c0_1, %c0_2] : memref<128x64xbf16, #tpu.memory_space<vmem>>, vector<128x64xbf16>
    %c0_3 = arith.constant 0 : index
    %c0_4 = arith.constant 0 : index
    %2 = vector.load %arg3[%c0_3, %c0_4] : memref<1x64xf32, #tpu.memory_space<vmem>>, vector<1x64xf32>
    %cst = arith.constant dense<0.000000e+00> : vector<16x64xf32>
    %3 = tpu.matmul %0, %1, %cst {dimension_numbers = #tpu.dot_dimension_numbers<[1], [0], [0], [1], [0, 0, 1, 1], [], []>} : vector<16x128xbf16>, vector<128x64xbf16>, vector<16x64xf32> -> vector<16x64xf32>
    %4 = vector.broadcast %2 : vector<1x64xf32> to vector<16x64xf32>
    %5 = arith.addf %3, %4 : vector<16x64xf32>
    %cst_5 = arith.constant 0.000000e+00 : f32
    %6 = vector.broadcast %cst_5 : f32 to vector<16x64xf32>
    %7 = arith.maximumf %5, %6 : vector<16x64xf32>
    %8 = arith.truncf %7 : vector<16x64xf32> to vector<16x64xbf16>
    %c0_6 = arith.constant 0 : index
    %c0_7 = arith.constant 0 : index
    %9 = vector.load %arg4[%c0_6, %c0_7] : memref<64x128xbf16, #tpu.memory_space<vmem>>, vector<64x128xbf16>
    %c0_8 = arith.constant 0 : index
    %c0_9 = arith.constant 0 : index
    %10 = vector.load %arg5[%c0_8, %c0_9] : memref<1x128xf32, #tpu.memory_space<vmem>>, vector<1x128xf32>
    %cst_10 = arith.constant dense<0.000000e+00> : vector<16x128xf32>
    %11 = tpu.matmul %8, %9, %cst_10 {dimension_numbers = #tpu.dot_dimension_numbers<[1], [0], [0], [1], [0, 0, 1, 1], [], []>} : vector<16x64xbf16>, vector<64x128xbf16>, vector<16x128xf32> -> vector<16x128xf32>
    %12 = vector.broadcast %10 : vector<1x128xf32> to vector<16x128xf32>
    %13 = arith.addf %11, %12 : vector<16x128xf32>
    %c0_11 = arith.constant 0 : index
    %c0_12 = arith.constant 0 : index
    %14 = vector.load %arg6[%c0_11, %c0_12] : memref<16x128xf32, #tpu.memory_space<vmem>>, vector<16x128xf32>
    tpu.vector_store %arg6[%c0_11, %c0_12], %13 {strides = array<i32>} : memref<16x128xf32, #tpu.memory_space<vmem>>, vector<16x128xf32>,
    return
  }
  func.func @transform_0(%arg0: i32) -> (i32, i32) {
    %c0_i32 = arith.constant 0 : i32
    %c0_i32_0 = arith.constant 0 : i32
    return %arg0, %c0_i32 : i32, i32
  }
  func.func @transform_1(%arg0: i32) -> (i32, i32) {
    %c0_i32 = arith.constant 0 : i32
    %c0_i32_0 = arith.constant 0 : i32
    %c0_i32_1 = arith.constant 0 : i32
    return %c0_i32, %c0_i32_0 : i32, i32
  }
  func.func @transform_2(%arg0: i32) -> (i32, i32) {
    %c0_i32 = arith.constant 0 : i32
    %c0_i32_0 = arith.constant 0 : i32
    %c0_i32_1 = arith.constant 0 : i32
    return %c0_i32, %c0_i32_0 : i32, i32
  }
  func.func @transform_3(%arg0: i32) -> (i32, i32) {
    %c0_i32 = arith.constant 0 : i32
    %c0_i32_0 = arith.constant 0 : i32
    %c0_i32_1 = arith.constant 0 : i32
    return %c0_i32, %c0_i32_0 : i32, i32
  }
  func.func @transform_4(%arg0: i32) -> (i32, i32) {
    %c0_i32 = arith.constant 0 : i32
    %c0_i32_0 = arith.constant 0 : i32
    %c0_i32_1 = arith.constant 0 : i32
    return %c0_i32, %c0_i32_0 : i32, i32
  }
  func.func @transform_5(%arg0: i32) -> (i32, i32) {
    %c0_i32 = arith.constant 0 : i32
    %c0_i32_0 = arith.constant 0 : i32
    return %arg0, %c0_i32 : i32, i32
  }
}

</mosaic_0001>

<llo_original>
// kernel: tpu_custom_call.1
$region0: #{tpu_custom_call.1}
  #allocation0 [shape = 'u32[]', space=smem, size = 0x4, offset = 0x4, fixed_abs, tag = 'smem constant byte address 0x4 - core index']
  #allocation1 [shape = 'u32[144,128]{1,0:T(1,128)}', space=vmem, size = 0x12000, scoped, tag = 'internal scratch']
  %s0 = inlined_call_operand.vmem [shape: bf16[16,128], index: 0, kind: input, shape index: {}]
  %s1 = inlined_call_operand.vmem [shape: bf16[128,64], index: 1, kind: input, shape index: {}]
  %s2 = inlined_call_operand.vmem [shape: f32[1,64], index: 2, kind: input, shape index: {}]
  %s3 = inlined_call_operand.vmem [shape: bf16[64,128], index: 3, kind: input, shape index: {}]
  %s4 = inlined_call_operand.vmem [shape: f32[1,128], index: 4, kind: input, shape index: {}]
  %s5 = inlined_call_operand.hbm [shape: f32[16,128], index: 5, kind: output, shape index: {}]
  %s6 = sld [smem:[#allocation0]]
  $region30: #{tpu_custom_call.1} parent=0
    _
  %s8 = ssub.s32 1, %s6
  %s9 = scalar_select 0, %s8, %s6
  $region1: #{tpu_custom_call.1} parent=0
    #allocation2 [shape = 'u8[8192]{0}', space=vmem, size = 0x2000, scoped, tag = 'output window, operand 0, single buffered']
    #allocation3 [shape = 's32[1]{0}', space=sflag, size = 0x4, scoped, tag = 'scoped memory for tpu_custom_call.1']
    %10 = vsyncpa [#allocation3], 0
    // Predicated region
    $region2: #{tpu_custom_call.1} parent=1 // pred_check
      _
    $region3: #{tpu_custom_call.1} parent=1 // pred_check_branch
      %12 = sbr.rel (0) target = $region5
    $region4: #{tpu_custom_call.1} parent=1 // pred_region
      _
    $region5: #{tpu_custom_call.1} parent=1 // pred_fallthru
      _
    // Predicated region
    $region6: #{tpu_custom_call.1} parent=1 // pred_check
      _
    $region7: #{tpu_custom_call.1} parent=1 // pred_check_branch
      %14 = sbr.rel (0) target = $region9
    $region8: #{tpu_custom_call.1} parent=1 // pred_region
      _
    $region9: #{tpu_custom_call.1} parent=1 // pred_fallthru
      _
    // Predicated region
    $region10: #{tpu_custom_call.1} parent=1 // pred_check
      _
    $region11: #{tpu_custom_call.1} parent=1 // pred_check_branch
      %16 = sbr.rel (0) target = $region13
    $region12: #{tpu_custom_call.1} parent=1 // pred_region
      _
    $region13: #{tpu_custom_call.1} parent=1 // pred_fallthru
      _
    // Predicated region
    $region14: #{tpu_custom_call.1} parent=1 // pred_check
      _
    $region15: #{tpu_custom_call.1} parent=1 // pred_check_branch
      %18 = sbr.rel (0) target = $region17
    $region16: #{tpu_custom_call.1} parent=1 // pred_region
      _
    $region17: #{tpu_custom_call.1} parent=1 // pred_fallthru
      _
    // Predicated region
    $region18: #{tpu_custom_call.1} parent=1 // pred_check
      _
    $region19: #{tpu_custom_call.1} parent=1 // pred_check_branch
      %20 = sbr.rel (0) target = $region21
    $region20: #{tpu_custom_call.1} parent=1 // pred_region
      _
    $region21: #{tpu_custom_call.1} parent=1 // pred_fallthru
      _
    %v22 = vld [vmem:[%s0] sm:$0xf]
    %v23 = vld [vmem:[%s0 + $0x4] sm:$0xf]
    %v24 = vld [vmem:[%s1] sm:$0xf]
    %v25 = vld [vmem:[%s1 + $0x4] sm:$0xf]
    %v26 = vld [vmem:[%s1 + $0x8] sm:$0xf]
    %v27 = vld [vmem:[%s1 + $0xc] sm:$0xf]
    %v28 = vld [vmem:[%s1 + $0x10] sm:$0xf]
    %v29 = vld [vmem:[%s1 + $0x14] sm:$0xf]
    %v30 = vld [vmem:[%s1 + $0x18] sm:$0xf]
    %v31 = vld [vmem:[%s1 + $0x1c] sm:$0xf]
    %v32 = vld [vmem:[%s1 + $0x20] sm:$0xf]
    %v33 = vld [vmem:[%s1 + $0x24] sm:$0xf]
    %v34 = vld [vmem:[%s1 + $0x28] sm:$0xf]
    %v35 = vld [vmem:[%s1 + $0x2c] sm:$0xf]
    %v36 = vld [vmem:[%s1 + $0x30] sm:$0xf]
    %v37 = vld [vmem:[%s1 + $0x34] sm:$0xf]
    %v38 = vld [vmem:[%s1 + $0x38] sm:$0xf]
    %v39 = vld [vmem:[%s1 + $0x3c] sm:$0xf]
    %v40 = vld [vmem:[%s2] sm:$0x1]
    %v42 = vlaneseq
    %v43 = vshrl.u32 %v42, 7
    %v44 = vsub.s32 0, %v43
    %v45 = vrot.slane %v40, %v44
    %v49 = vunpack.c.l.b16 %v22
    %v50 = vunpack.c.l.b16 %v23
    %v51 = vpack.c.b16 %v50, %v49
    %v69 = vunpack.c.l.b16 %v24
    %v70 = vunpack.c.l.b16 %v25
    %v71 = vunpack.c.l.b16 %v26
    %v72 = vunpack.c.l.b16 %v27
    %v73 = vunpack.c.l.b16 %v28
    %v74 = vunpack.c.l.b16 %v29
    %v75 = vunpack.c.l.b16 %v30
    %v76 = vunpack.c.l.b16 %v31
    %v77 = vunpack.c.l.b16 %v32
    %v78 = vunpack.c.l.b16 %v33
    %v79 = vunpack.c.l.b16 %v34
    %v80 = vunpack.c.l.b16 %v35
    %v81 = vunpack.c.l.b16 %v36
    %v82 = vunpack.c.l.b16 %v37
    %v83 = vunpack.c.l.b16 %v38
    %v84 = vunpack.c.l.b16 %v39
    %v85 = vpack.c.b16 %v70, %v69
    %v86 = vpack.c.b16 %v72, %v71
    %v87 = vpack.c.b16 %v74, %v73
    %v88 = vpack.c.b16 %v76, %v75
    %v89 = vpack.c.b16 %v78, %v77
    %v90 = vpack.c.b16 %v80, %v79
    %v91 = vpack.c.b16 %v82, %v81
    %v92 = vpack.c.b16 %v84, %v83
    %101 = vmatprep.subr.bf16.mxu0 0
    %102 = vmatpush1.bf16.msra.mxu0 %v92
    %103 = vmatprep.subr.bf16.mxu0 0
    %104 = vmatpush1.bf16.msra.mxu0 %v91
    %105 = vmatprep.subr.bf16.mxu0 0
    %106 = vmatpush1.bf16.msra.mxu0 %v90
    %107 = vmatprep.subr.bf16.mxu0 0
    %108 = vmatpush1.bf16.msra.mxu0 %v89
    %109 = vmatprep.subr.bf16.mxu0 0
    %110 = vmatpush1.bf16.msra.mxu0 %v88
    %111 = vmatprep.subr.bf16.mxu0 0
    %112 = vmatpush1.bf16.msra.mxu0 %v87
    %113 = vmatprep.subr.bf16.mxu0 0
    %114 = vmatpush1.bf16.msra.mxu0 %v86
    %115 = vmatprep.subr.bf16.mxu0 0
    %116 = vmatpush1.bf16.msra.mxu0 %v85
    %117 = vmatprep.subr.bf16.mxu0 0
    %118 = vmatpush2.bf16.msra.mxu0 0
    %119 = vmatprep.subr.bf16.mxu0 0
    %120 = vmatpush2.bf16.msra.mxu0 0
    %121 = vmatprep.subr.bf16.mxu0 0
    %122 = vmatpush2.bf16.msra.mxu0 0
    %123 = vmatprep.subr.bf16.mxu0 0
    %124 = vmatpush2.bf16.msra.mxu0 0
    %125 = vmatprep.subr.bf16.mxu0 0
    %126 = vmatpush2.bf16.msra.mxu0 0
    %127 = vmatprep.subr.bf16.mxu0 0
    %128 = vmatpush2.bf16.msra.mxu0 0
    %129 = vmatprep.subr.bf16.mxu0 0
    %130 = vmatpush2.bf16.msra.mxu0 0
    %131 = vmatprep.subr.bf16.mxu0 0
    %132 = vmatpush2.bf16.msra.mxu0 0
    %133 = vmatprep.mubr.bf16.mxu0 0
    %134 = vmatmul.mubr.bf16.gmra.mxu0 %v51
    %v135 = vpop.f32.mrf.mxu0
    %v136 = vadd.f32 %v45, %v135
    %v137 = vpop.f32.mrf.mxu0
    %v138 = vpop.f32.mrf.mxu0
    %v139 = vadd.f32 %v45, %v138
    %v140 = vpop.f32.mrf.mxu0
    %141 = vdwg.mxu0
    %v142 = vmax.f32 %v136, 0.0
    %v143 = vmax.f32 %v139, 0.0
    %v144 = vpack.c.bf16 %v143, %v142
    %v145 = vld [vmem:[%s3] sm:$0xf]
    %v146 = vld [vmem:[%s3 + $0x4] sm:$0xf]
    %v147 = vld [vmem:[%s3 + $0x8] sm:$0xf]
    %v148 = vld [vmem:[%s3 + $0xc] sm:$0xf]
    %v149 = vld [vmem:[%s3 + $0x10] sm:$0xf]
    %v150 = vld [vmem:[%s3 + $0x14] sm:$0xf]
    %v151 = vld [vmem:[%s3 + $0x18] sm:$0xf]
    %v152 = vld [vmem:[%s3 + $0x1c] sm:$0xf]
    %v153 = vld [vmem:[%s4] sm:$0x1]
    %v155 = vlaneseq
    %v156 = vshrl.u32 %v155, 7
    %v157 = vsub.s32 0, %v156
    %v158 = vrot.slane %v153, %v157
    %v168 = vunpack.c.l.b16 %v145
    %v169 = vunpack.c.l.b16 %v146
    %v170 = vunpack.c.l.b16 %v147
    %v171 = vunpack.c.l.b16 %v148
    %v172 = vunpack.c.l.b16 %v149
    %v173 = vunpack.c.l.b16 %v150
    %v174 = vunpack.c.l.b16 %v151
    %v175 = vunpack.c.l.b16 %v152
    %v176 = vpack.c.b16 %v169, %v168
    %v177 = vpack.c.b16 %v171, %v170
    %v178 = vpack.c.b16 %v173, %v172
    %v179 = vpack.c.b16 %v175, %v174
    %vm184 = vcmask 523264
    %v186 = vsel %vm184, %v144, 0
    %188 = vmatprep.subr.bf16.mxu0 0
    %189 = vmatpush1.bf16.msra.mxu0 0
    %190 = vmatprep.subr.bf16.mxu0 0
    %191 = vmatpush1.bf16.msra.mxu0 0
    %192 = vmatprep.subr.bf16.mxu0 0
    %193 = vmatpush1.bf16.msra.mxu0 0
    %194 = vmatprep.subr.bf16.mxu0 0
    %195 = vmatpush1.bf16.msra.mxu0 0
    %196 = vmatprep.subr.bf16.mxu0 0
    %197 = vmatpush1.bf16.msra.mxu0 %v179
    %198 = vmatprep.subr.bf16.mxu0 0
    %199 = vmatpush1.bf16.msra.mxu0 %v178
    %200 = vmatprep.subr.bf16.mxu0 0
    %201 = vmatpush1.bf16.msra.mxu0 %v177
    %202 = vmatprep.subr.bf16.mxu0 0
    %203 = vmatpush1.bf16.msra.mxu0 %v176
    %204 = vmatprep.subr.bf16.mxu0 0
    %205 = vmatpush2.bf16.msra.mxu0 0
    %206 = vmatprep.subr.bf16.mxu0 0
    %207 = vmatpush2.bf16.msra.mxu0 0
    %208 = vmatprep.subr.bf16.mxu0 0
    %209 = vmatpush2.bf16.msra.mxu0 0
    %210 = vmatprep.subr.bf16.mxu0 0
    %211 = vmatpush2.bf16.msra.mxu0 0
    %212 = vmatprep.subr.bf16.mxu0 0
    %213 = vmatpush2.bf16.msra.mxu0 0
    %214 = vmatprep.subr.bf16.mxu0 0
    %215 = vmatpush2.bf16.msra.mxu0 0
    %216 = vmatprep.subr.bf16.mxu0 0
    %217 = vmatpush2.bf16.msra.mxu0 0
    %218 = vmatprep.subr.bf16.mxu0 0
    %219 = vmatpush2.bf16.msra.mxu0 0
    %220 = vmatprep.mubr.bf16.mxu0 0
    %221 = vmatmul.mubr.bf16.gmra.mxu0 %v186
    %v222 = vpop.f32.mrf.mxu0
    %v223 = vadd.f32 %v158, %v222
    %v224 = vpop.f32.mrf.mxu0
    %v225 = vpop.f32.mrf.mxu0
    %v226 = vadd.f32 %v158, %v225
    %v227 = vpop.f32.mrf.mxu0
    %228 = vdwg.mxu0
    %229 = vst [vmem:[#allocation2] sm:$0xff] %v223
    %230 = vst [vmem:[#allocation2 + $0x8] sm:$0xff] %v226
    // Predicated region
    $region22: #{tpu_custom_call.1} parent=1 // pred_check
      _
    $region23: #{tpu_custom_call.1} parent=1 // pred_check_branch
      %232 = sbr.rel (0) target = $region25
    $region24: #{tpu_custom_call.1} parent=1 // pred_region
      %s234 = ssub.s32 256, 256
      %235 = vsyncadd [#allocation3], %s234
      %s236 = sshll.u32 [#allocation2], 4
      %s237 = int_to_ptr.vmem [resolvable:$true] %s236
      %242 = dma.vmem_to_hbm [thread:$0]  %s237, 256, %s5, [#allocation3], 128, 128, 8
    $region25: #{tpu_custom_call.1} parent=1 // pred_fallthru
      _
    // Predicated region
    $region26: #{tpu_custom_call.1} parent=1 // pred_check
      _
    $region27: #{tpu_custom_call.1} parent=1 // pred_check_branch
      %244 = sbr.rel (0) target = $region29
    $region28: #{tpu_custom_call.1} parent=1 // pred_region
      %245 = dma.done [#allocation3], 256
    $region29: #{tpu_custom_call.1} parent=1 // pred_fallthru
      _
    %246 = vsyncpa [#allocation3], 1

</llo_original>
